<compile_context>
chip_gen: v5e
topology: v5e:2x2
jax: 0.10.0
libtpu: 0.0.40
codegen_flags: <defaults>
</compile_context>

<pallas_src>
import jax
import jax.numpy as jnp
from jax.experimental import pallas as pl
from jax.experimental.pallas import tpu as pltpu

# ---- scaled-down module dimensions ------------------------------------------
SPACIAL_DIM = 4                       # stand-in for CLIP's 14 (HW = 16)
EMBED_DIM = 32                        # stand-in for 1024/2048
NUM_HEADS = 4
HEAD_DIM = EMBED_DIM // NUM_HEADS
OUTPUT_DIM = 32                       # c_proj output width
HW = SPACIAL_DIM * SPACIAL_DIM
SEQ = HW + 1                          # CLS + spatial tokens


# ---- fused attention-pool kernel --------------------------------------------
def _pool_with_map_kernel(x_ref, pos_cls_ref, pos_rest_ref,
                          wq_ref, bq_ref, wk_ref, bk_ref, wv_ref, bv_ref,
                          wc_ref, bc_ref, sel_ref, selt_ref, out_ref):
    TB, hw, C = x_ref.shape
    H = sel_ref.shape[1]
    scale = (C // H) ** -0.5

    x = x_ref[...]                                               # (TB, HW, C)

    # token construction: CLS = spatial mean + pos[0]; rest = x + pos[1:]
    cls_tok = jnp.mean(x, axis=1) + pos_cls_ref[...]             # (TB, C)
    rest_tok = (x + pos_rest_ref[...][None, :, :]).reshape(TB * hw, C)

    wq = wq_ref[...]; wk = wk_ref[...]; wv = wv_ref[...]
    bq = bq_ref[...]; bk = bk_ref[...]; bv = bv_ref[...]
    sel = sel_ref[...]; selt = selt_ref[...]

    # projections (query = CLS token only); q pre-scaled by 1/sqrt(head_dim)
    q = (jnp.dot(cls_tok, wq, preferred_element_type=jnp.float32) + bq) * scale   # (TB, C)
    k_cls = jnp.dot(cls_tok, wk, preferred_element_type=jnp.float32) + bk          # (TB, C)
    v_cls = jnp.dot(cls_tok, wv, preferred_element_type=jnp.float32) + bv          # (TB, C)
    k_rest = jnp.dot(rest_tok, wk, preferred_element_type=jnp.float32) + bk        # (TB*HW, C)
    v_rest = jnp.dot(rest_tok, wv, preferred_element_type=jnp.float32) + bv        # (TB*HW, C)
    k_rest3 = k_rest.reshape(TB, hw, C)
    v_rest3 = v_rest.reshape(TB, hw, C)

    # per-head attention scores via head-selector matmul (MXU)
    s_cls = jnp.dot(q * k_cls, sel, preferred_element_type=jnp.float32)            # (TB, H)
    prod = q[:, None, :] * k_rest3                                                  # (TB, HW, C)
    s_rest = jnp.dot(prod.reshape(TB * hw, C), sel,
                     preferred_element_type=jnp.float32).reshape(TB, hw, H)         # (TB, HW, H)

    # numerically-stable softmax over the SEQ = HW+1 keys, per (sample, head)
    m = jnp.maximum(s_cls, jnp.max(s_rest, axis=1))                                 # (TB, H)
    e_cls = jnp.exp(s_cls - m)                                                      # (TB, H)
    e_rest = jnp.exp(s_rest - m[:, None, :])                                        # (TB, HW, H)
    denom = e_cls + jnp.sum(e_rest, axis=1)                                         # (TB, H)
    inv = pl.reciprocal(denom, approx=True)                                         # EUP slot

    # broadcast head weights back to channels (MXU) and pool the values
    a_cls = jnp.dot(e_cls, selt, preferred_element_type=jnp.float32)                # (TB, C)
    a_rest = jnp.dot(e_rest.reshape(TB * hw, H), selt,
                     preferred_element_type=jnp.float32).reshape(TB, hw, C)         # (TB, HW, C)
    inv_c = jnp.dot(inv, selt, preferred_element_type=jnp.float32)                  # (TB, C)

    pooled = (a_cls * v_cls + jnp.sum(a_rest * v_rest3, axis=1)) * inv_c            # (TB, C)

    # c_proj
    out = jnp.dot(pooled, wc_ref[...], preferred_element_type=jnp.float32) + bc_ref[...]
    out_ref[...] = out[:, None, :].astype(out_ref.dtype)                            # (TB, 1, OUT)


# ---- wrapper -----------------------------------------------------------------
def pool_with_map_forward(x, loss_map, params, *, block_b=None):
    """PoolWithMap.forward.  x, loss_map: (B, C, Hs, Ws) NCHW -> (B, OUTPUT_DIM)."""
    # The processed loss_map / `queries` never feed the returned value in the
    # reference forward (dead code), so the kernel does not consume them.
    del loss_map
    B, C, Hs, Ws = x.shape
    hw = Hs * Ws
    assert C == EMBED_DIM and hw == HW

    if block_b is None:
        # amortize per-step overhead, but keep >=2 grid steps (v7x dual TC)
        block_b = max(1, min(8, B // 2))
        while B % block_b:
            block_b -= 1
    num_blocks = B // block_b

    # NCHW -> channels-last, spatially flattened (pure layout glue)
    x_flat = x.astype(jnp.float32).reshape(B, C, hw).transpose(0, 2, 1)     # (B, HW, C)

    pos = params["pos"].astype(jnp.float32)
    pos_cls, pos_rest = pos[:1], pos[1:]

    # torch Linear convention y = x @ W.T + b  -> pass W.T to the kernel
    wq_t, wk_t, wv_t = params["wq"].T, params["wk"].T, params["wv"].T
    wc_t = params["wc"].T
    bq = params["bq"][None, :]
    bk = params["bk"][None, :]
    bv = params["bv"][None, :]
    bc = params["bc"][None, :]

    # head-selector matrix: sel[c, h] = 1 if channel c belongs to head h
    sel = (jnp.arange(C)[:, None] // HEAD_DIM
           == jnp.arange(NUM_HEADS)[None, :]).astype(jnp.float32)           # (C, H)
    selt = sel.T                                                             # (H, C)

    def shared(shape):
        n = len(shape)
        return pl.BlockSpec(shape, lambda i: (0,) * n)

    out = pl.pallas_call(
        _pool_with_map_kernel,
        out_shape=jax.ShapeDtypeStruct((B, 1, OUTPUT_DIM), jnp.float32),
        grid=(num_blocks,),
        in_specs=[
            pl.BlockSpec((block_b, hw, C), lambda i: (i, 0, 0)),   # x tokens
            shared((1, C)),                                        # pos[0]
            shared((hw, C)),                                       # pos[1:]
            shared((C, C)), shared((1, C)),                        # q_proj W.T, b
            shared((C, C)), shared((1, C)),                        # k_proj W.T, b
            shared((C, C)), shared((1, C)),                        # v_proj W.T, b
            shared((C, OUTPUT_DIM)), shared((1, OUTPUT_DIM)),      # c_proj W.T, b
            shared((C, NUM_HEADS)), shared((NUM_HEADS, C)),        # head selectors
        ],
        out_specs=pl.BlockSpec((block_b, 1, OUTPUT_DIM), lambda i: (i, 0, 0)),
        compiler_params=pltpu.CompilerParams(dimension_semantics=("parallel",)),
    )(x_flat, pos_cls, pos_rest,
      wq_t, bq, wk_t, bk, wv_t, bv, wc_t, bc, sel, selt)
    return out[:, 0, :]


# ---- pure-JAX reference (mirrors the PyTorch forward) --------------------------
def pool_with_map_reference(x, loss_map, params):
    B, C, Hs, Ws = x.shape
    xf = x.reshape(B, C, Hs * Ws).transpose(2, 0, 1)                         # (HW, B, C)
    xf = jnp.concatenate([xf.mean(axis=0, keepdims=True), xf], axis=0)
    xf = xf + params["pos"][:, None, :]
    lm = loss_map.reshape(B, C, Hs * Ws).transpose(2, 0, 1)
    lm = jnp.concatenate([lm.mean(axis=0, keepdims=True), lm], axis=0)
    lm = lm + params["pos"][:, None, :]
    _queries = jnp.concatenate([xf[:1], lm[:1]], axis=0)                     # unused (as in reference)

    q = xf[:1] @ params["wq"].T + params["bq"]                               # (1, B, C)
    k = xf @ params["wk"].T + params["bk"]                                   # (S, B, C)
    v = xf @ params["wv"].T + params["bv"]
    hd = C // NUM_HEADS
    qh = q.reshape(1, B, NUM_HEADS, hd) * (hd ** -0.5)
    kh = k.reshape(-1, B, NUM_HEADS, hd)
    vh = v.reshape(-1, B, NUM_HEADS, hd)
    s = jnp.einsum('qbhd,kbhd->bhqk', qh, kh)
    a = jax.nn.softmax(s, axis=-1)
    o = jnp.einsum('bhqk,kbhd->qbhd', a, vh).reshape(1, B, C)
    out = o @ params["wc"].T + params["bc"]
    return out[0]


# ---- deterministic parameter init ----------------------------------------------
def init_params(key):
    ks = jax.random.split(key, 9)
    C, OUT = EMBED_DIM, OUTPUT_DIM
    w = lambda k, shp, s: jax.random.normal(k, shp, jnp.float32) * s
    return {
        "pos": w(ks[0], (SEQ, C), C ** -0.5),         # nn.Parameter(randn(S, C)/sqrt(C))
        "wq": w(ks[1], (C, C), 0.08), "bq": w(ks[2], (C,), 0.02),
        "wk": w(ks[3], (C, C), 0.08), "bk": w(ks[4], (C,), 0.02),
        "wv": w(ks[5], (C, C), 0.08), "bv": w(ks[6], (C,), 0.02),
        "wc": w(ks[7], (OUT, C), 0.08), "bc": w(ks[8], (OUT,), 0.02),
    }


if __name__ == "__main__":
    key = jax.random.PRNGKey(0)
    k_x, k_lm, k_p = jax.random.split(key, 3)
    B = 2
    x = jax.random.normal(k_x, (B, EMBED_DIM, SPACIAL_DIM, SPACIAL_DIM), jnp.float32)
    loss_map = jax.random.normal(k_lm, (B, EMBED_DIM, SPACIAL_DIM, SPACIAL_DIM), jnp.float32)
    params = init_params(k_p)

    out = jax.block_until_ready(pool_with_map_forward(x, loss_map, params))
    assert out.shape == (B, OUTPUT_DIM), out.shape

    ref = jax.block_until_ready(pool_with_map_reference(x, loss_map, params))
    err = float(jnp.max(jnp.abs(out - ref)))
    assert jnp.allclose(out, ref, rtol=2e-2, atol=2e-2), err
    print("KERNEL_OK")
</pallas_src>

<mosaic_0001>
module attributes {stable_mosaic.version = 11 : i64} {
  func.func @_pool_with_map_kernel(%arg0: i32, %arg1: memref<1x16x32xf32, #tpu.memory_space<vmem>>, %arg2: memref<1x32xf32, #tpu.memory_space<vmem>>, %arg3: memref<16x32xf32, #tpu.memory_space<vmem>>, %arg4: memref<32x32xf32, #tpu.memory_space<vmem>>, %arg5: memref<1x32xf32, #tpu.memory_space<vmem>>, %arg6: memref<32x32xf32, #tpu.memory_space<vmem>>, %arg7: memref<1x32xf32, #tpu.memory_space<vmem>>, %arg8: memref<32x32xf32, #tpu.memory_space<vmem>>, %arg9: memref<1x32xf32, #tpu.memory_space<vmem>>, %arg10: memref<32x32xf32, #tpu.memory_space<vmem>>, %arg11: memref<1x32xf32, #tpu.memory_space<vmem>>, %arg12: memref<32x4xf32, #tpu.memory_space<vmem>>, %arg13: memref<4x32xf32, #tpu.memory_space<vmem>>, %arg14: memref<1x1x32xf32, #tpu.memory_space<vmem>>) attributes {dimension_semantics = [#tpu.dimension_semantics<parallel>], iteration_bounds = array<i64: 2>, scalar_prefetch = 0 : i64, scratch_operands = 0 : i64, tpu.core_type = #tpu.core_type<tc>, window_params = [{transform_indices = @transform_0, window_bounds = array<i64: 1, 16, 32>}, {pipeline_mode = #tpu.pipeline_mode<synchronous>, transform_indices = @transform_1, window_bounds = array<i64: 1, 32>}, {pipeline_mode = #tpu.pipeline_mode<synchronous>, transform_indices = @transform_2, window_bounds = array<i64: 16, 32>}, {pipeline_mode = #tpu.pipeline_mode<synchronous>, transform_indices = @transform_3, window_bounds = array<i64: 32, 32>}, {pipeline_mode = #tpu.pipeline_mode<synchronous>, transform_indices = @transform_4, window_bounds = array<i64: 1, 32>}, {pipeline_mode = #tpu.pipeline_mode<synchronous>, transform_indices = @transform_5, window_bounds = array<i64: 32, 32>}, {pipeline_mode = #tpu.pipeline_mode<synchronous>, transform_indices = @transform_6, window_bounds = array<i64: 1, 32>}, {pipeline_mode = #tpu.pipeline_mode<synchronous>, transform_indices = @transform_7, window_bounds = array<i64: 32, 32>}, {pipeline_mode = #tpu.pipeline_mode<synchronous>, transform_indices = @transform_8, window_bounds = array<i64: 1, 32>}, {pipeline_mode = #tpu.pipeline_mode<synchronous>, transform_indices = @transform_9, window_bounds = array<i64: 32, 32>}, {pipeline_mode = #tpu.pipeline_mode<synchronous>, transform_indices = @transform_10, window_bounds = array<i64: 1, 32>}, {pipeline_mode = #tpu.pipeline_mode<synchronous>, transform_indices = @transform_11, window_bounds = array<i64: 32, 4>}, {pipeline_mode = #tpu.pipeline_mode<synchronous>, transform_indices = @transform_12, window_bounds = array<i64: 4, 32>}, {transform_indices = @transform_13, window_bounds = array<i64: 1, 1, 32>}]} {
    %c0 = arith.constant 0 : index
    %c0_0 = arith.constant 0 : index
    %c0_1 = arith.constant 0 : index
    %0 = vector.load %arg1[%c0, %c0_0, %c0_1] : memref<1x16x32xf32, #tpu.memory_space<vmem>>, vector<1x16x32xf32>
    %cst = arith.constant dense<0.000000e+00> : vector<1x32xf32>
    %1 = vector.multi_reduction <add>, %0, %cst [1] : vector<1x16x32xf32> to vector<1x32xf32>
    %cst_2 = arith.constant 1.600000e+01 : f32
    %2 = vector.broadcast %cst_2 : f32 to vector<1x32xf32>
    %3 = arith.divf %1, %2 : vector<1x32xf32>
    %c0_3 = arith.constant 0 : index
    %c0_4 = arith.constant 0 : index
    %4 = vector.load %arg2[%c0_3, %c0_4] : memref<1x32xf32, #tpu.memory_space<vmem>>, vector<1x32xf32>
    %5 = arith.addf %3, %4 : vector<1x32xf32>
    %c0_5 = arith.constant 0 : index
    %c0_6 = arith.constant 0 : index
    %6 = vector.load %arg3[%c0_5, %c0_6] : memref<16x32xf32, #tpu.memory_space<vmem>>, vector<16x32xf32>
    %7 = vector.shape_cast %6 : vector<16x32xf32> to vector<1x16x32xf32>
    %8 = arith.addf %0, %7 : vector<1x16x32xf32>
    %9 = vector.shape_cast %8 : vector<1x16x32xf32> to vector<16x32xf32>
    %c0_7 = arith.constant 0 : index
    %c0_8 = arith.constant 0 : index
    %10 = vector.load %arg4[%c0_7, %c0_8] : memref<32x32xf32, #tpu.memory_space<vmem>>, vector<32x32xf32>
    %c0_9 = arith.constant 0 : index
    %c0_10 = arith.constant 0 : index
    %11 = vector.load %arg6[%c0_9, %c0_10] : memref<32x32xf32, #tpu.memory_space<vmem>>, vector<32x32xf32>
    %c0_11 = arith.constant 0 : index
    %c0_12 = arith.constant 0 : index
    %12 = vector.load %arg8[%c0_11, %c0_12] : memref<32x32xf32, #tpu.memory_space<vmem>>, vector<32x32xf32>
    %c0_13 = arith.constant 0 : index
    %c0_14 = arith.constant 0 : index
    %13 = vector.load %arg5[%c0_13, %c0_14] : memref<1x32xf32, #tpu.memory_space<vmem>>, vector<1x32xf32>
    %c0_15 = arith.constant 0 : index
    %c0_16 = arith.constant 0 : index
    %14 = vector.load %arg7[%c0_15, %c0_16] : memref<1x32xf32, #tpu.memory_space<vmem>>, vector<1x32xf32>
    %c0_17 = arith.constant 0 : index
    %c0_18 = arith.constant 0 : index
    %15 = vector.load %arg9[%c0_17, %c0_18] : memref<1x32xf32, #tpu.memory_space<vmem>>, vector<1x32xf32>
    %c0_19 = arith.constant 0 : index
    %c0_20 = arith.constant 0 : index
    %16 = vector.load %arg12[%c0_19, %c0_20] : memref<32x4xf32, #tpu.memory_space<vmem>>, vector<32x4xf32>
    %c0_21 = arith.constant 0 : index
    %c0_22 = arith.constant 0 : index
    %17 = vector.load %arg13[%c0_21, %c0_22] : memref<4x32xf32, #tpu.memory_space<vmem>>, vector<4x32xf32>
    %cst_23 = arith.constant dense<0.000000e+00> : vector<1x32xf32>
    %18 = tpu.matmul %5, %10, %cst_23 {dimension_numbers = #tpu.dot_dimension_numbers<[1], [0], [0], [1], [0, 0, 1, 1], [], []>} : vector<1x32xf32>, vector<32x32xf32>, vector<1x32xf32> -> vector<1x32xf32>
    %19 = arith.addf %18, %13 : vector<1x32xf32>
    %cst_24 = arith.constant 0.353553385 : f32
    %20 = vector.broadcast %cst_24 : f32 to vector<1x32xf32>
    %21 = arith.mulf %19, %20 : vector<1x32xf32>
    %cst_25 = arith.constant dense<0.000000e+00> : vector<1x32xf32>
    %22 = tpu.matmul %5, %11, %cst_25 {dimension_numbers = #tpu.dot_dimension_numbers<[1], [0], [0], [1], [0, 0, 1, 1], [], []>} : vector<1x32xf32>, vector<32x32xf32>, vector<1x32xf32> -> vector<1x32xf32>
    %23 = arith.addf %22, %14 : vector<1x32xf32>
    %cst_26 = arith.constant dense<0.000000e+00> : vector<1x32xf32>
    %24 = tpu.matmul %5, %12, %cst_26 {dimension_numbers = #tpu.dot_dimension_numbers<[1], [0], [0], [1], [0, 0, 1, 1], [], []>} : vector<1x32xf32>, vector<32x32xf32>, vector<1x32xf32> -> vector<1x32xf32>
    %25 = arith.addf %24, %15 : vector<1x32xf32>
    %cst_27 = arith.constant dense<0.000000e+00> : vector<16x32xf32>
    %26 = tpu.matmul %9, %11, %cst_27 {dimension_numbers = #tpu.dot_dimension_numbers<[1], [0], [0], [1], [0, 0, 1, 1], [], []>} : vector<16x32xf32>, vector<32x32xf32>, vector<16x32xf32> -> vector<16x32xf32>
    %27 = vector.broadcast %14 : vector<1x32xf32> to vector<16x32xf32>
    %28 = arith.addf %26, %27 : vector<16x32xf32>
    %cst_28 = arith.constant dense<0.000000e+00> : vector<16x32xf32>
    %29 = tpu.matmul %9, %12, %cst_28 {dimension_numbers = #tpu.dot_dimension_numbers<[1], [0], [0], [1], [0, 0, 1, 1], [], []>} : vector<16x32xf32>, vector<32x32xf32>, vector<16x32xf32> -> vector<16x32xf32>
    %30 = vector.broadcast %15 : vector<1x32xf32> to vector<16x32xf32>
    %31 = arith.addf %29, %30 : vector<16x32xf32>
    %32 = vector.shape_cast %28 : vector<16x32xf32> to vector<1x16x32xf32>
    %33 = vector.shape_cast %31 : vector<16x32xf32> to vector<1x16x32xf32>
    %34 = arith.mulf %21, %23 : vector<1x32xf32>
    %cst_29 = arith.constant dense<0.000000e+00> : vector<1x4xf32>
    %35 = tpu.matmul %34, %16, %cst_29 {dimension_numbers = #tpu.dot_dimension_numbers<[1], [0], [0], [1], [0, 0, 1, 1], [], []>} : vector<1x32xf32>, vector<32x4xf32>, vector<1x4xf32> -> vector<1x4xf32>
    %36 = vector.shape_cast %21 : vector<1x32xf32> to vector<1x1x32xf32>
    %37 = vector.broadcast %36 : vector<1x1x32xf32> to vector<1x16x32xf32>
    %38 = arith.mulf %37, %32 : vector<1x16x32xf32>
    %39 = vector.shape_cast %38 : vector<1x16x32xf32> to vector<16x32xf32>
    %cst_30 = arith.constant dense<0.000000e+00> : vector<16x4xf32>
    %40 = tpu.matmul %39, %16, %cst_30 {dimension_numbers = #tpu.dot_dimension_numbers<[1], [0], [0], [1], [0, 0, 1, 1], [], []>} : vector<16x32xf32>, vector<32x4xf32>, vector<16x4xf32> -> vector<16x4xf32>
    %41 = vector.shape_cast %40 : vector<16x4xf32> to vector<1x16x4xf32>
    %cst_31 = arith.constant dense<0xFF800000> : vector<1x4xf32>
    %42 = vector.multi_reduction <maximumf>, %41, %cst_31 [1] : vector<1x16x4xf32> to vector<1x4xf32>
    %43 = arith.maximumf %35, %42 : vector<1x4xf32>
    %44 = arith.subf %35, %43 : vector<1x4xf32>
    %45 = math.exp %44 : vector<1x4xf32>
    %46 = vector.shape_cast %43 : vector<1x4xf32> to vector<1x1x4xf32>
    %47 = vector.broadcast %46 : vector<1x1x4xf32> to vector<1x16x4xf32>
    %48 = arith.subf %41, %47 : vector<1x16x4xf32>
    %49 = math.exp %48 : vector<1x16x4xf32>
    %cst_32 = arith.constant dense<0.000000e+00> : vector<1x4xf32>
    %50 = vector.multi_reduction <add>, %49, %cst_32 [1] : vector<1x16x4xf32> to vector<1x4xf32>
    %51 = arith.addf %45, %50 : vector<1x4xf32>
    %52 = tpu.reciprocal %51 {approx = true} : vector<1x4xf32> -> vector<1x4xf32>
    %cst_33 = arith.constant dense<0.000000e+00> : vector<1x32xf32>
    %53 = tpu.matmul %45, %17, %cst_33 {dimension_numbers = #tpu.dot_dimension_numbers<[1], [0], [0], [1], [0, 0, 1, 1], [], []>} : vector<1x4xf32>, vector<4x32xf32>, vector<1x32xf32> -> vector<1x32xf32>
    %54 = vector.shape_cast %49 : vector<1x16x4xf32> to vector<16x4xf32>
    %cst_34 = arith.constant dense<0.000000e+00> : vector<16x32xf32>
    %55 = tpu.matmul %54, %17, %cst_34 {dimension_numbers = #tpu.dot_dimension_numbers<[1], [0], [0], [1], [0, 0, 1, 1], [], []>} : vector<16x4xf32>, vector<4x32xf32>, vector<16x32xf32> -> vector<16x32xf32>
    %56 = vector.shape_cast %55 : vector<16x32xf32> to vector<1x16x32xf32>
    %cst_35 = arith.constant dense<0.000000e+00> : vector<1x32xf32>
    %57 = tpu.matmul %52, %17, %cst_35 {dimension_numbers = #tpu.dot_dimension_numbers<[1], [0], [0], [1], [0, 0, 1, 1], [], []>} : vector<1x4xf32>, vector<4x32xf32>, vector<1x32xf32> -> vector<1x32xf32>
    %58 = arith.mulf %53, %25 : vector<1x32xf32>
    %59 = arith.mulf %56, %33 : vector<1x16x32xf32>
    %cst_36 = arith.constant dense<0.000000e+00> : vector<1x32xf32>
    %60 = vector.multi_reduction <add>, %59, %cst_36 [1] : vector<1x16x32xf32> to vector<1x32xf32>
    %61 = arith.addf %58, %60 : vector<1x32xf32>
    %62 = arith.mulf %61, %57 : vector<1x32xf32>
    %c0_37 = arith.constant 0 : index
    %c0_38 = arith.constant 0 : index
    %63 = vector.load %arg10[%c0_37, %c0_38] : memref<32x32xf32, #tpu.memory_space<vmem>>, vector<32x32xf32>
    %cst_39 = arith.constant dense<0.000000e+00> : vector<1x32xf32>
    %64 = tpu.matmul %62, %63, %cst_39 {dimension_numbers = #tpu.dot_dimension_numbers<[1], [0], [0], [1], [0, 0, 1, 1], [], []>} : vector<1x32xf32>, vector<32x32xf32>, vector<1x32xf32> -> vector<1x32xf32>
    %c0_40 = arith.constant 0 : index
    %c0_41 = arith.constant 0 : index
    %65 = vector.load %arg11[%c0_40, %c0_41] : memref<1x32xf32, #tpu.memory_space<vmem>>, vector<1x32xf32>
    %66 = arith.addf %64, %65 : vector<1x32xf32>
    %67 = vector.shape_cast %66 : vector<1x32xf32> to vector<1x1x32xf32>
    %c0_42 = arith.constant 0 : index
    %c0_43 = arith.constant 0 : index
    %c0_44 = arith.constant 0 : index
    %68 = vector.load %arg14[%c0_42, %c0_43, %c0_44] : memref<1x1x32xf32, #tpu.memory_space<vmem>>, vector<1x1x32xf32>
    tpu.vector_store %arg14[%c0_42, %c0_43, %c0_44], %67 {strides = array<i32>} : memref<1x1x32xf32, #tpu.memory_space<vmem>>, vector<1x1x32xf32>,
    return
  }
  func.func @transform_0(%arg0: i32) -> (i32, i32, i32) {
    %c0_i32 = arith.constant 0 : i32
    %c0_i32_0 = arith.constant 0 : i32
    %c0_i32_1 = arith.constant 0 : i32
    return %arg0, %c0_i32, %c0_i32_0 : i32, i32, i32
  }
  func.func @transform_1(%arg0: i32) -> (i32, i32) {
    %c0_i32 = arith.constant 0 : i32
    %c0_i32_0 = arith.constant 0 : i32
    %c0_i32_1 = arith.constant 0 : i32
    return %c0_i32, %c0_i32_0 : i32, i32
  }
  func.func @transform_2(%arg0: i32) -> (i32, i32) {
    %c0_i32 = arith.constant 0 : i32
    %c0_i32_0 = arith.constant 0 : i32
    %c0_i32_1 = arith.constant 0 : i32
    return %c0_i32, %c0_i32_0 : i32, i32
  }
  func.func @transform_3(%arg0: i32) -> (i32, i32) {
    %c0_i32 = arith.constant 0 : i32
    %c0_i32_0 = arith.constant 0 : i32
    %c0_i32_1 = arith.constant 0 : i32
    return %c0_i32, %c0_i32_0 : i32, i32
  }
  func.func @transform_4(%arg0: i32) -> (i32, i32) {
    %c0_i32 = arith.constant 0 : i32
    %c0_i32_0 = arith.constant 0 : i32
    %c0_i32_1 = arith.constant 0 : i32
    return %c0_i32, %c0_i32_0 : i32, i32
  }
  func.func @transform_5(%arg0: i32) -> (i32, i32) {
    %c0_i32 = arith.constant 0 : i32
    %c0_i32_0 = arith.constant 0 : i32
    %c0_i32_1 = arith.constant 0 : i32
    return %c0_i32, %c0_i32_0 : i32, i32
  }
  func.func @transform_6(%arg0: i32) -> (i32, i32) {
    %c0_i32 = arith.constant 0 : i32
    %c0_i32_0 = arith.constant 0 : i32
    %c0_i32_1 = arith.constant 0 : i32
    return %c0_i32, %c0_i32_0 : i32, i32
  }
  func.func @transform_7(%arg0: i32) -> (i32, i32) {
    %c0_i32 = arith.constant 0 : i32
    %c0_i32_0 = arith.constant 0 : i32
    %c0_i32_1 = arith.constant 0 : i32
    return %c0_i32, %c0_i32_0 : i32, i32
  }
  func.func @transform_8(%arg0: i32) -> (i32, i32) {
    %c0_i32 = arith.constant 0 : i32
    %c0_i32_0 = arith.constant 0 : i32
    %c0_i32_1 = arith.constant 0 : i32
    return %c0_i32, %c0_i32_0 : i32, i32
  }
  func.func @transform_9(%arg0: i32) -> (i32, i32) {
    %c0_i32 = arith.constant 0 : i32
    %c0_i32_0 = arith.constant 0 : i32
    %c0_i32_1 = arith.constant 0 : i32
    return %c0_i32, %c0_i32_0 : i32, i32
  }
  func.func @transform_10(%arg0: i32) -> (i32, i32) {
    %c0_i32 = arith.constant 0 : i32
    %c0_i32_0 = arith.constant 0 : i32
    %c0_i32_1 = arith.constant 0 : i32
    return %c0_i32, %c0_i32_0 : i32, i32
  }
  func.func @transform_11(%arg0: i32) -> (i32, i32) {
    %c0_i32 = arith.constant 0 : i32
    %c0_i32_0 = arith.constant 0 : i32
    %c0_i32_1 = arith.constant 0 : i32
    return %c0_i32, %c0_i32_0 : i32, i32
  }
  func.func @transform_12(%arg0: i32) -> (i32, i32) {
    %c0_i32 = arith.constant 0 : i32
    %c0_i32_0 = arith.constant 0 : i32
    %c0_i32_1 = arith.constant 0 : i32
    return %c0_i32, %c0_i32_0 : i32, i32
  }
  func.func @transform_13(%arg0: i32) -> (i32, i32, i32) {
    %c0_i32 = arith.constant 0 : i32
    %c0_i32_0 = arith.constant 0 : i32
    %c0_i32_1 = arith.constant 0 : i32
    return %arg0, %c0_i32, %c0_i32_0 : i32, i32, i32
  }
}

</mosaic_0001>

<llo_original>
// kernel: tpu_custom_call.1
$region0: #{tpu_custom_call.1}
  #allocation0 [shape = 'u32[]', space=smem, size = 0x4, offset = 0x4, fixed_abs, tag = 'smem constant byte address 0x4 - core index']
  #allocation1 [shape = 'u32[72,128]{1,0:T(1,128)}', space=vmem, size = 0x9000, scoped, tag = 'internal scratch']
  %s0 = inlined_call_operand.vmem [shape: f32[2,16,32], index: 0, kind: input, shape index: {}]
  %s1 = inlined_call_operand.hbm [shape: f32[1,32], index: 1, kind: input, shape index: {}]
  %s2 = inlined_call_operand.hbm [shape: f32[16,32], index: 2, kind: input, shape index: {}]
  %s3 = inlined_call_operand.hbm [shape: f32[32,32], index: 3, kind: input, shape index: {}]
  %s4 = inlined_call_operand.vmem [shape: f32[1,32], index: 4, kind: input, shape index: {}]
  %s5 = inlined_call_operand.hbm [shape: f32[32,32], index: 5, kind: input, shape index: {}]
  %s6 = inlined_call_operand.vmem [shape: f32[1,32], index: 6, kind: input, shape index: {}]
  %s7 = inlined_call_operand.hbm [shape: f32[32,32], index: 7, kind: input, shape index: {}]
  %s8 = inlined_call_operand.vmem [shape: f32[1,32], index: 8, kind: input, shape index: {}]
  %s9 = inlined_call_operand.hbm [shape: f32[32,32], index: 9, kind: input, shape index: {}]
  %s10 = inlined_call_operand.vmem [shape: f32[1,32], index: 10, kind: input, shape index: {}]
  %s11 = inlined_call_operand.vmem [shape: f32[32,4], index: 11, kind: input, shape index: {}]
  %s12 = inlined_call_operand.vmem [shape: f32[4,32], index: 12, kind: input, shape index: {}]
  %s13 = inlined_call_operand.hbm [shape: f32[2,1,32], index: 13, kind: output, shape index: {}]
  %s14 = sld [smem:[#allocation0]]
  $region109: #{tpu_custom_call.1} parent=0
    _
  %s16 = ssub.s32 1, %s14
  %s17 = scalar_select 0, %s16, %s14
  $region1: #{tpu_custom_call.1} parent=0
    #allocation2 [shape = 'u8[512]{0}', space=vmem, size = 0x400, scoped, tag = 'input window, operand 1, single buffered']
    #allocation3 [shape = 's32[2]{0}', space=sflag, size = 0x8, scoped, tag = 'scoped memory for tpu_custom_call.1']
    #allocation4 [shape = 's32[2]{0}', space=sflag, size = 0x8, scoped, tag = 'scoped memory for tpu_custom_call.1']
    #allocation5 [shape = 'u8[8192]{0}', space=vmem, size = 0x2000, scoped, tag = 'input window, operand 2, single buffered']
    #allocation6 [shape = 's32[1]{0}', space=sflag, size = 0x4, scoped, tag = 'scoped memory for tpu_custom_call.1']
    #allocation7 [shape = 'u8[16384]{0}', space=vmem, size = 0x4000, scoped, tag = 'input window, operand 3, single buffered']
    #allocation8 [shape = 'u8[16384]{0}', space=vmem, size = 0x4000, scoped, tag = 'input window, operand 5, single buffered']
    #allocation9 [shape = 's32[1]{0}', space=sflag, size = 0x4, scoped, tag = 'scoped memory for tpu_custom_call.1']
    #allocation10 [shape = 'u8[16384]{0}', space=vmem, size = 0x4000, scoped, tag = 'input window, operand 7, single buffered']
    #allocation11 [shape = 'u8[16384]{0}', space=vmem, size = 0x4000, scoped, tag = 'input window, operand 9, single buffered']
    #allocation12 [shape = 's32[1]{0}', space=sflag, size = 0x4, scoped, tag = 'scoped memory for tpu_custom_call.1']
    #allocation13 [shape = 'u8[1024]{0}', space=vmem, size = 0x400, scoped, tag = 'output window, operand 0']
    %18 = vsyncpa [#allocation3], 0
    %19 = vsyncpa [#allocation6], 0
    %20 = vsyncpa [#allocation9], 0
    %21 = vsyncpa [#allocation12], 0
    %22 = vsyncpa [#allocation4], 0
    %s23 = scalar_lea.sflag [#allocation4], 1
    %24 = vsyncpa %s23, 0
    loop: start=0, step=1, limit=4
    $region2: #{tpu_custom_call.1} parent=1 // loop_pre_header
      _
    $region3: #{tpu_custom_call.1} parent=1 // loop_header
      %s26 = sphi 0, %s30
      %p27 = scmp.ge.s32.totalorder %s26, 4
      %s36 = sphi 0, %s38
      %s39 = sphi 0, %s36
      %s40 = sphi 0, %s39
      %s56 = sphi 0, %s40
      %s60 = sphi 0, %s60
      %s62 = sphi 0, %s60
      %s63 = sphi 0, %s62
      %s77 = sphi 0, %s63
      %s81 = sphi 0, %s81
      %s83 = sphi 0, %s81
      %s84 = sphi 0, %s83
      %s98 = sphi 0, %s84
      %s102 = sphi 0, %s102
      %s104 = sphi 0, %s102
      %s105 = sphi 0, %s104
      %s119 = sphi 0, %s105
      %s123 = sphi 0, %s123
      %s125 = sphi 0, %s123
      %s126 = sphi 0, %s125
      %s140 = sphi 0, %s126
      %s144 = sphi 0, %s144
      %s146 = sphi 0, %s144
      %s147 = sphi 0, %s146
      %s161 = sphi 0, %s147
      %s165 = sphi 0, %s165
      %s167 = sphi 0, %s165
      %s168 = sphi 0, %s167
      %s182 = sphi 0, %s168
      %s186 = sphi 0, %s186
      %s188 = sphi 0, %s186
      %s189 = sphi 0, %s188
      %s203 = sphi 0, %s189
      %s207 = sphi 0, %s207
      %s209 = sphi 0, %s207
      %s210 = sphi 0, %s209
      %s224 = sphi 0, %s210
      %s228 = sphi 0, %s228
      %s230 = sphi 0, %s228
      %s231 = sphi 0, %s230
      %s245 = sphi 0, %s231
      %s249 = sphi 0, %s249
      %s251 = sphi 0, %s249
      %s252 = sphi 0, %s251
      %s266 = sphi 0, %s252
      %s270 = sphi 0, %s270
      %s272 = sphi 0, %s270
      %s273 = sphi 0, %s272
      %s287 = sphi 0, %s273
      %s291 = sphi 0, %s291
      %s293 = sphi 0, %s291
      %s294 = sphi 0, %s293
      %s308 = sphi 0, %s294
      %s314 = sphi 0, %s316
      %s317 = sphi 0, %s314
      %s318 = sphi 0, %s317
      %s334 = sphi 0, %s318
    $region4: #{tpu_custom_call.1} parent=1 // loop_header_branch
      %29 = sbr.rel (%p27) target = $region8
    $region5: #{tpu_custom_call.1} parent=1 // loop_body
      %s31 = ssub.s32 %s26, 1
      %s32 = ssub.s32 %s26, 2
      %s33 = sadd.s32 %s26, 1
      %s34 = ssub.s32 %s26, %s33
      %p35 = scmp.eq.s32.totalorder %s34, 0
      %s37 = sadd.s32 %s36, 1
      %s38 = scalar_select %p35, %s36, %s37
      %p41 = pneg %p35
      %p42 = scmp.eq.s32.totalorder %s26, 1
      %p43 = por %p41, %p42
      %p44 = scmp.ne.s32.totalorder %s36, %s39
      %p45 = scmp.eq.s32.totalorder %s26, 0
      %p46 = por %p44, %p45
      %p47 = scmp.ne.s32.totalorder %s36, %s39
      %p48 = scmp.eq.s32.totalorder %s31, 1
      %p49 = por %p47, %p48
      %p50 = scmp.ne.s32.totalorder %s39, %s40
      %p51 = scmp.eq.s32.totalorder %s31, 0
      %p52 = por %p50, %p51
      %p53 = scmp.ne.s32.totalorder %s39, %s40
      %p54 = scmp.eq.s32.totalorder %s32, 1
      %p55 = por %p53, %p54
      %p57 = scmp.ne.s32.totalorder %s40, %s56
      %p58 = scmp.eq.s32.totalorder %s32, 0
      %p59 = por %p57, %p58
      %s61 = sadd.s32 %s60, 1
      %p64 = scmp.eq.s32.totalorder %s26, 1
      %p65 = scmp.ne.s32.totalorder %s60, %s62
      %p66 = scmp.eq.s32.totalorder %s26, 0
      %p67 = por %p65, %p66
      %p68 = scmp.ne.s32.totalorder %s60, %s62
      %p69 = scmp.eq.s32.totalorder %s31, 1
      %p70 = por %p68, %p69
      %p71 = scmp.ne.s32.totalorder %s62, %s63
      %p72 = scmp.eq.s32.totalorder %s31, 0
      %p73 = por %p71, %p72
      %p74 = scmp.ne.s32.totalorder %s62, %s63
      %p75 = scmp.eq.s32.totalorder %s32, 1
      %p76 = por %p74, %p75
      %p78 = scmp.ne.s32.totalorder %s63, %s77
      %p79 = scmp.eq.s32.totalorder %s32, 0
      %p80 = por %p78, %p79
      %s82 = sadd.s32 %s81, 1
      %p85 = scmp.eq.s32.totalorder %s26, 1
      %p86 = scmp.ne.s32.totalorder %s81, %s83
      %p87 = scmp.eq.s32.totalorder %s26, 0
      %p88 = por %p86, %p87
      %p89 = scmp.ne.s32.totalorder %s81, %s83
      %p90 = scmp.eq.s32.totalorder %s31, 1
      %p91 = por %p89, %p90
      %p92 = scmp.ne.s32.totalorder %s83, %s84
      %p93 = scmp.eq.s32.totalorder %s31, 0
      %p94 = por %p92, %p93
      %p95 = scmp.ne.s32.totalorder %s83, %s84
      %p96 = scmp.eq.s32.totalorder %s32, 1
      %p97 = por %p95, %p96
      %p99 = scmp.ne.s32.totalorder %s84, %s98
      %p100 = scmp.eq.s32.totalorder %s32, 0
      %p101 = por %p99, %p100
      %s103 = sadd.s32 %s102, 1
      %p106 = scmp.eq.s32.totalorder %s26, 1
      %p107 = scmp.ne.s32.totalorder %s102, %s104
      %p108 = scmp.eq.s32.totalorder %s26, 0
      %p109 = por %p107, %p108
      %p110 = scmp.ne.s32.totalorder %s102, %s104
      %p111 = scmp.eq.s32.totalorder %s31, 1
      %p112 = por %p110, %p111
      %p113 = scmp.ne.s32.totalorder %s104, %s105
      %p114 = scmp.eq.s32.totalorder %s31, 0
      %p115 = por %p113, %p114
      %p116 = scmp.ne.s32.totalorder %s104, %s105
      %p117 = scmp.eq.s32.totalorder %s32, 1
      %p118 = por %p116, %p117
      %p120 = scmp.ne.s32.totalorder %s105, %s119
      %p121 = scmp.eq.s32.totalorder %s32, 0
      %p122 = por %p120, %p121
      %s124 = sadd.s32 %s123, 1
      %p127 = scmp.eq.s32.totalorder %s26, 1
      %p128 = scmp.ne.s32.totalorder %s123, %s125
      %p129 = scmp.eq.s32.totalorder %s26, 0
      %p130 = por %p128, %p129
      %p131 = scmp.ne.s32.totalorder %s123, %s125
      %p132 = scmp.eq.s32.totalorder %s31, 1
      %p133 = por %p131, %p132
      %p134 = scmp.ne.s32.totalorder %s125, %s126
      %p135 = scmp.eq.s32.totalorder %s31, 0
      %p136 = por %p134, %p135
      %p137 = scmp.ne.s32.totalorder %s125, %s126
      %p138 = scmp.eq.s32.totalorder %s32, 1
      %p139 = por %p137, %p138
      %p141 = scmp.ne.s32.totalorder %s126, %s140
      %p142 = scmp.eq.s32.totalorder %s32, 0
      %p143 = por %p141, %p142
      %s145 = sadd.s32 %s144, 1
      %p148 = scmp.eq.s32.totalorder %s26, 1
      %p149 = scmp.ne.s32.totalorder %s144, %s146
      %p150 = scmp.eq.s32.totalorder %s26, 0
      %p151 = por %p149, %p150
      %p152 = scmp.ne.s32.totalorder %s144, %s146
      %p153 = scmp.eq.s32.totalorder %s31, 1
      %p154 = por %p152, %p153
      %p155 = scmp.ne.s32.totalorder %s146, %s147
      %p156 = scmp.eq.s32.totalorder %s31, 0
      %p157 = por %p155, %p156
      %p158 = scmp.ne.s32.totalorder %s146, %s147
      %p159 = scmp.eq.s32.totalorder %s32, 1
      %p160 = por %p158, %p159
      %p162 = scmp.ne.s32.totalorder %s147, %s161
      %p163 = scmp.eq.s32.totalorder %s32, 0
      %p164 = por %p162, %p163
      %s166 = sadd.s32 %s165, 1
      %p169 = scmp.eq.s32.totalorder %s26, 1
      %p170 = scmp.ne.s32.totalorder %s165, %s167
      %p171 = scmp.eq.s32.totalorder %s26, 0
      %p172 = por %p170, %p171
      %p173 = scmp.ne.s32.totalorder %s165, %s167
      %p174 = scmp.eq.s32.totalorder %s31, 1
      %p175 = por %p173, %p174
      %p176 = scmp.ne.s32.totalorder %s167, %s168
      %p177 = scmp.eq.s32.totalorder %s31, 0
      %p178 = por %p176, %p177
      %p179 = scmp.ne.s32.totalorder %s167, %s168
      %p180 = scmp.eq.s32.totalorder %s32, 1
      %p181 = por %p179, %p180
      %p183 = scmp.ne.s32.totalorder %s168, %s182
      %p184 = scmp.eq.s32.totalorder %s32, 0
      %p185 = por %p183, %p184
      %s187 = sadd.s32 %s186, 1
      %p190 = scmp.eq.s32.totalorder %s26, 1
      %p191 = scmp.ne.s32.totalorder %s186, %s188
      %p192 = scmp.eq.s32.totalorder %s26, 0
      %p193 = por %p191, %p192
      %p194 = scmp.ne.s32.totalorder %s186, %s188
      %p195 = scmp.eq.s32.totalorder %s31, 1
      %p196 = por %p194, %p195
      %p197 = scmp.ne.s32.totalorder %s188, %s189
      %p198 = scmp.eq.s32.totalorder %s31, 0
      %p199 = por %p197, %p198
      %p200 = scmp.ne.s32.totalorder %s188, %s189
      %p201 = scmp.eq.s32.totalorder %s32, 1
      %p202 = por %p200, %p201
      %p204 = scmp.ne.s32.totalorder %s189, %s203
      %p205 = scmp.eq.s32.totalorder %s32, 0
      %p206 = por %p204, %p205
      %s208 = sadd.s32 %s207, 1
      %p211 = scmp.eq.s32.totalorder %s26, 1
      %p212 = scmp.ne.s32.totalorder %s207, %s209
      %p213 = scmp.eq.s32.totalorder %s26, 0
      %p214 = por %p212, %p213
      %p215 = scmp.ne.s32.totalorder %s207, %s209
      %p216 = scmp.eq.s32.totalorder %s31, 1
      %p217 = por %p215, %p216
      %p218 = scmp.ne.s32.totalorder %s209, %s210
      %p219 = scmp.eq.s32.totalorder %s31, 0
      %p220 = por %p218, %p219
      %p221 = scmp.ne.s32.totalorder %s209, %s210
      %p222 = scmp.eq.s32.totalorder %s32, 1
      %p223 = por %p221, %p222
      %p225 = scmp.ne.s32.totalorder %s210, %s224
      %p226 = scmp.eq.s32.totalorder %s32, 0
      %p227 = por %p225, %p226
      %s229 = sadd.s32 %s228, 1
      %p232 = scmp.eq.s32.totalorder %s26, 1
      %p233 = scmp.ne.s32.totalorder %s228, %s230
      %p234 = scmp.eq.s32.totalorder %s26, 0
      %p235 = por %p233, %p234
      %p236 = scmp.ne.s32.totalorder %s228, %s230
      %p237 = scmp.eq.s32.totalorder %s31, 1
      %p238 = por %p236, %p237
      %p239 = scmp.ne.s32.totalorder %s230, %s231
      %p240 = scmp.eq.s32.totalorder %s31, 0
      %p241 = por %p239, %p240
      %p242 = scmp.ne.s32.totalorder %s230, %s231
      %p243 = scmp.eq.s32.totalorder %s32, 1
      %p244 = por %p242, %p243
      %p246 = scmp.ne.s32.totalorder %s231, %s245
      %p247 = scmp.eq.s32.totalorder %s32, 0
      %p248 = por %p246, %p247
      %s250 = sadd.s32 %s249, 1
      %p253 = scmp.eq.s32.totalorder %s26, 1
      %p254 = scmp.ne.s32.totalorder %s249, %s251
      %p255 = scmp.eq.s32.totalorder %s26, 0
      %p256 = por %p254, %p255
      %p257 = scmp.ne.s32.totalorder %s249, %s251
      %p258 = scmp.eq.s32.totalorder %s31, 1
      %p259 = por %p257, %p258
      %p260 = scmp.ne.s32.totalorder %s251, %s252
      %p261 = scmp.eq.s32.totalorder %s31, 0
      %p262 = por %p260, %p261
      %p263 = scmp.ne.s32.totalorder %s251, %s252
      %p264 = scmp.eq.s32.totalorder %s32, 1
      %p265 = por %p263, %p264
      %p267 = scmp.ne.s32.totalorder %s252, %s266
      %p268 = scmp.eq.s32.totalorder %s32, 0
      %p269 = por %p267, %p268
      %s271 = sadd.s32 %s270, 1
      %p274 = scmp.eq.s32.totalorder %s26, 1
      %p275 = scmp.ne.s32.totalorder %s270, %s272
      %p276 = scmp.eq.s32.totalorder %s26, 0
      %p277 = por %p275, %p276
      %p278 = scmp.ne.s32.totalorder %s270, %s272
      %p279 = scmp.eq.s32.totalorder %s31, 1
      %p280 = por %p278, %p279
      %p281 = scmp.ne.s32.totalorder %s272, %s273
      %p282 = scmp.eq.s32.totalorder %s31, 0
      %p283 = por %p281, %p282
      %p284 = scmp.ne.s32.totalorder %s272, %s273
      %p285 = scmp.eq.s32.totalorder %s32, 1
      %p286 = por %p284, %p285
      %p288 = scmp.ne.s32.totalorder %s273, %s287
      %p289 = scmp.eq.s32.totalorder %s32, 0
      %p290 = por %p288, %p289
      %s292 = sadd.s32 %s291, 1
      %p295 = scmp.eq.s32.totalorder %s26, 1
      %p296 = scmp.ne.s32.totalorder %s291, %s293
      %p297 = scmp.eq.s32.totalorder %s26, 0
      %p298 = por %p296, %p297
      %p299 = scmp.ne.s32.totalorder %s291, %s293
      %p300 = scmp.eq.s32.totalorder %s31, 1
      %p301 = por %p299, %p300
      %p302 = scmp.ne.s32.totalorder %s293, %s294
      %p303 = scmp.eq.s32.totalorder %s31, 0
      %p304 = por %p302, %p303
      %p305 = scmp.ne.s32.totalorder %s293, %s294
      %p306 = scmp.eq.s32.totalorder %s32, 1
      %p307 = por %p305, %p306
      %p309 = scmp.ne.s32.totalorder %s294, %s308
      %p310 = scmp.eq.s32.totalorder %s32, 0
      %p311 = por %p309, %p310
      %s312 = ssub.s32 %s26, %s33
      %p313 = scmp.eq.s32.totalorder %s312, 0
      %s315 = sadd.s32 %s314, 1
      %s316 = scalar_select %p313, %s314, %s315
      %p319 = pneg %p313
      %p320 = scmp.eq.s32.totalorder %s26, 1
      %p321 = por %p319, %p320
      %p322 = scmp.ne.s32.totalorder %s314, %s317
      %p323 = scmp.eq.s32.totalorder %s26, 0
      %p324 = por %p322, %p323
      %p325 = scmp.ne.s32.totalorder %s314, %s317
      %p326 = scmp.eq.s32.totalorder %s31, 1
      %p327 = por %p325, %p326
      %p328 = scmp.ne.s32.totalorder %s317, %s318
      %p329 = scmp.eq.s32.totalorder %s31, 0
      %p330 = por %p328, %p329
      %p331 = scmp.ne.s32.totalorder %s317, %s318
      %p332 = scmp.eq.s32.totalorder %s32, 1
      %p333 = por %p331, %p332
      %p335 = scmp.ne.s32.totalorder %s318, %s334
      %p336 = scmp.eq.s32.totalorder %s32, 0
      %p337 = por %p335, %p336
      %p338 = scmp.le.s32.totalorder 1, %s26
      %p339 = scmp.lt.s32.totalorder %s26, 3
      %p340 = pnand %p338, %p339
      %p341 = pneg %p340
      // Predicated region
      $region9: #{tpu_custom_call.1} parent=5 // pred_check
        _
      $region10: #{tpu_custom_call.1} parent=5 // pred_check_branch
        %343 = sbr.rel (%p340) target = $region12
      $region11: #{tpu_custom_call.1} parent=5 // pred_region
        %s344 = ssub.s32 %s26, 1
        // Predicated region
        $region13: #{tpu_custom_call.1} parent=11 // pred_check
          %p345 = pneg %p73
        $region14: #{tpu_custom_call.1} parent=11 // pred_check_branch
          %347 = sbr.rel (%p345) target = $region16
        $region15: #{tpu_custom_call.1} parent=11 // pred_region
          %349 = vsyncadd [#allocation3], 0
          %s351 = sshll.u32 %s1, 4
          %s352 = int_to_ptr.hbm [resolvable:$true] %s351
          %s353 = sshll.u32 [#allocation2], 4
          %s354 = int_to_ptr.vmem [resolvable:$true] %s353
          %356 = dma.hbm_to_vmem [thread:$0]  %s352, 16, %s354, [#allocation3]
        $region16: #{tpu_custom_call.1} parent=11 // pred_fallthru
          _
        // Predicated region
        $region17: #{tpu_custom_call.1} parent=11 // pred_check
          %p357 = pneg %p94
        $region18: #{tpu_custom_call.1} parent=11 // pred_check_branch
          %359 = sbr.rel (%p357) target = $region20
        $region19: #{tpu_custom_call.1} parent=11 // pred_region
          %361 = vsyncadd [#allocation6], 0
          %s362 = sshll.u32 %s2, 4
          %s363 = int_to_ptr.hbm [resolvable:$true] %s362
          %s364 = sshll.u32 [#allocation5], 4
          %s365 = int_to_ptr.vmem [resolvable:$true] %s364
          %370 = dma.hbm_to_vmem [thread:$0]  %s363, 256, %s365, [#allocation6], 128, 128, 8
        $region20: #{tpu_custom_call.1} parent=11 // pred_fallthru
          _
        // Predicated region
        $region21: #{tpu_custom_call.1} parent=11 // pred_check
          %p371 = pneg %p115
        $region22: #{tpu_custom_call.1} parent=11 // pred_check_branch
          %373 = sbr.rel (%p371) target = $region24
        $region23: #{tpu_custom_call.1} parent=11 // pred_region
          %375 = vsyncadd [#allocation6], 0
          %s376 = sshll.u32 %s3, 4
          %s377 = int_to_ptr.hbm [resolvable:$true] %s376
          %s378 = sshll.u32 [#allocation7], 4
          %s379 = int_to_ptr.vmem [resolvable:$true] %s378
          %384 = dma.hbm_to_vmem [thread:$0]  %s377, 512, %s379, [#allocation6], 128, 128, 8
        $region24: #{tpu_custom_call.1} parent=11 // pred_fallthru
          _
        // Predicated region
        $region25: #{tpu_custom_call.1} parent=11 // pred_check
          %p385 = pneg %p136
        $region26: #{tpu_custom_call.1} parent=11 // pred_check_branch
          %387 = sbr.rel (%p385) target = $region28
        $region27: #{tpu_custom_call.1} parent=11 // pred_region
          _
        $region28: #{tpu_custom_call.1} parent=11 // pred_fallthru
          _
        // Predicated region
        $region29: #{tpu_custom_call.1} parent=11 // pred_check
          %p388 = pneg %p157
        $region30: #{tpu_custom_call.1} parent=11 // pred_check_branch
          %390 = sbr.rel (%p388) target = $region32
        $region31: #{tpu_custom_call.1} parent=11 // pred_region
          %392 = vsyncadd [#allocation9], 0
          %s393 = sshll.u32 %s5, 4
          %s394 = int_to_ptr.hbm [resolvable:$true] %s393
          %s395 = sshll.u32 [#allocation8], 4
          %s396 = int_to_ptr.vmem [resolvable:$true] %s395
          %401 = dma.hbm_to_vmem [thread:$0]  %s394, 512, %s396, [#allocation9], 128, 128, 8
        $region32: #{tpu_custom_call.1} parent=11 // pred_fallthru
          _
        // Predicated region
        $region33: #{tpu_custom_call.1} parent=11 // pred_check
          %p402 = pneg %p178
        $region34: #{tpu_custom_call.1} parent=11 // pred_check_branch
          %404 = sbr.rel (%p402) target = $region36
        $region35: #{tpu_custom_call.1} parent=11 // pred_region
          _
        $region36: #{tpu_custom_call.1} parent=11 // pred_fallthru
          _
        // Predicated region
        $region37: #{tpu_custom_call.1} parent=11 // pred_check
          %p405 = pneg %p199
        $region38: #{tpu_custom_call.1} parent=11 // pred_check_branch
          %407 = sbr.rel (%p405) target = $region40
        $region39: #{tpu_custom_call.1} parent=11 // pred_region
          %409 = vsyncadd [#allocation9], 0
          %s410 = sshll.u32 %s7, 4
          %s411 = int_to_ptr.hbm [resolvable:$true] %s410
          %s412 = sshll.u32 [#allocation10], 4
          %s413 = int_to_ptr.vmem [resolvable:$true] %s412
          %418 = dma.hbm_to_vmem [thread:$0]  %s411, 512, %s413, [#allocation9], 128, 128, 8
        $region40: #{tpu_custom_call.1} parent=11 // pred_fallthru
          _
        // Predicated region
        $region41: #{tpu_custom_call.1} parent=11 // pred_check
          %p419 = pneg %p220
        $region42: #{tpu_custom_call.1} parent=11 // pred_check_branch
          %421 = sbr.rel (%p419) target = $region44
        $region43: #{tpu_custom_call.1} parent=11 // pred_region
          _
        $region44: #{tpu_custom_call.1} parent=11 // pred_fallthru
          _
        // Predicated region
        $region45: #{tpu_custom_call.1} parent=11 // pred_check
          %p422 = pneg %p241
        $region46: #{tpu_custom_call.1} parent=11 // pred_check_branch
          %424 = sbr.rel (%p422) target = $region48
        $region47: #{tpu_custom_call.1} parent=11 // pred_region
          %426 = vsyncadd [#allocation12], 0
          %s427 = sshll.u32 %s9, 4
          %s428 = int_to_ptr.hbm [resolvable:$true] %s427
          %s429 = sshll.u32 [#allocation11], 4
          %s430 = int_to_ptr.vmem [resolvable:$true] %s429
          %435 = dma.hbm_to_vmem [thread:$0]  %s428, 512, %s430, [#allocation12], 128, 128, 8
        $region48: #{tpu_custom_call.1} parent=11 // pred_fallthru
          _
        // Predicated region
        $region49: #{tpu_custom_call.1} parent=11 // pred_check
          %p436 = pneg %p262
        $region50: #{tpu_custom_call.1} parent=11 // pred_check_branch
          %438 = sbr.rel (%p436) target = $region52
        $region51: #{tpu_custom_call.1} parent=11 // pred_region
          _
        $region52: #{tpu_custom_call.1} parent=11 // pred_fallthru
          _
        // Predicated region
        $region53: #{tpu_custom_call.1} parent=11 // pred_check
          %p439 = pneg %p283
        $region54: #{tpu_custom_call.1} parent=11 // pred_check_branch
          %441 = sbr.rel (%p439) target = $region56
        $region55: #{tpu_custom_call.1} parent=11 // pred_region
          _
        $region56: #{tpu_custom_call.1} parent=11 // pred_fallthru
          _
        // Predicated region
        $region57: #{tpu_custom_call.1} parent=11 // pred_check
          %p442 = pneg %p304
        $region58: #{tpu_custom_call.1} parent=11 // pred_check_branch
          %444 = sbr.rel (%p442) target = $region60
        $region59: #{tpu_custom_call.1} parent=11 // pred_region
          _
        $region60: #{tpu_custom_call.1} parent=11 // pred_fallthru
          _
      $region12: #{tpu_custom_call.1} parent=5 // pred_fallthru
        _
      %p445 = scmp.lt.s32.totalorder %s26, 2
      // Predicated region
      $region61: #{tpu_custom_call.1} parent=5 // pred_check
        %p446 = pneg %p445
      $region62: #{tpu_custom_call.1} parent=5 // pred_check_branch
        %448 = sbr.rel (%p446) target = $region64
      $region63: #{tpu_custom_call.1} parent=5 // pred_region
        // Predicated region
        $region65: #{tpu_custom_call.1} parent=63 // pred_check
          %p449 = pneg %p46
        $region66: #{tpu_custom_call.1} parent=63 // pred_check_branch
          %451 = sbr.rel (%p449) target = $region68
        $region67: #{tpu_custom_call.1} parent=63 // pred_region
          %p452 = scmp.lt.s32.totalorder %s26, 1
          %s453 = scalar_select %p452, %s26, 1
          %s454 = smul.addr %s453, 2
          %s455 = smul.addr %s454, 8
          %s456 = scalar_lea.vmem %s0, %s455
        $region68: #{tpu_custom_call.1} parent=63 // pred_fallthru
          _
      $region64: #{tpu_custom_call.1} parent=5 // pred_fallthru
        _
      %p457 = scmp.le.s32.totalorder 1, %s26
      %p458 = scmp.lt.s32.totalorder %s26, 3
      %p459 = pnand %p457, %p458
      %p460 = pneg %p459
      // Predicated region
      $region69: #{tpu_custom_call.1} parent=5 // pred_check
        _
      $region70: #{tpu_custom_call.1} parent=5 // pred_check_branch
        %462 = sbr.rel (%p459) target = $region72
      $region71: #{tpu_custom_call.1} parent=5 // pred_region
        %s463 = ssub.s32 %s26, 1
        // Predicated region
        $region73: #{tpu_custom_call.1} parent=71 // pred_check
          %p464 = pneg %p73
        $region74: #{tpu_custom_call.1} parent=71 // pred_check_branch
          %466 = sbr.rel (%p464) target = $region76
        $region75: #{tpu_custom_call.1} parent=71 // pred_region
          %468 = dma.done [#allocation3], 16
        $region76: #{tpu_custom_call.1} parent=71 // pred_fallthru
          _
        // Predicated region
        $region77: #{tpu_custom_call.1} parent=71 // pred_check
          %p469 = pneg %p94
        $region78: #{tpu_custom_call.1} parent=71 // pred_check_branch
          %471 = sbr.rel (%p469) target = $region80
        $region79: #{tpu_custom_call.1} parent=71 // pred_region
          %473 = dma.done [#allocation6], 256
        $region80: #{tpu_custom_call.1} parent=71 // pred_fallthru
          _
        // Predicated region
        $region81: #{tpu_custom_call.1} parent=71 // pred_check
          %p474 = pneg %p115
        $region82: #{tpu_custom_call.1} parent=71 // pred_check_branch
          %476 = sbr.rel (%p474) target = $region84
        $region83: #{tpu_custom_call.1} parent=71 // pred_region
          %478 = dma.done [#allocation6], 512
        $region84: #{tpu_custom_call.1} parent=71 // pred_fallthru
          _
        // Predicated region
        $region85: #{tpu_custom_call.1} parent=71 // pred_check
          %p479 = pneg %p157
        $region86: #{tpu_custom_call.1} parent=71 // pred_check_branch
          %481 = sbr.rel (%p479) target = $region88
        $region87: #{tpu_custom_call.1} parent=71 // pred_region
          %483 = dma.done [#allocation9], 512
        $region88: #{tpu_custom_call.1} parent=71 // pred_fallthru
          _
        // Predicated region
        $region89: #{tpu_custom_call.1} parent=71 // pred_check
          %p484 = pneg %p199
        $region90: #{tpu_custom_call.1} parent=71 // pred_check_branch
          %486 = sbr.rel (%p484) target = $region92
        $region91: #{tpu_custom_call.1} parent=71 // pred_region
          %488 = dma.done [#allocation9], 512
        $region92: #{tpu_custom_call.1} parent=71 // pred_fallthru
          _
        // Predicated region
        $region93: #{tpu_custom_call.1} parent=71 // pred_check
          %p489 = pneg %p241
        $region94: #{tpu_custom_call.1} parent=71 // pred_check_branch
          %491 = sbr.rel (%p489) target = $region96
        $region95: #{tpu_custom_call.1} parent=71 // pred_region
          %493 = dma.done [#allocation12], 512
        $region96: #{tpu_custom_call.1} parent=71 // pred_fallthru
          _
        %p494 = scmp.lt.s32.totalorder %s31, 1
        %s495 = scalar_select %p494, %s31, 1
        %s496 = smul.addr %s495, 2
        %s497 = smul.addr %s496, 8
        %s498 = scalar_lea.vmem %s0, %s497
        %p499 = pneg %p52
        %p500 = pneg %p49
        %p501 = pneg %p73
        %p502 = pneg %p70
        %p503 = pneg %p94
        %p504 = pneg %p91
        %p505 = pneg %p115
        %p506 = pneg %p112
        %p507 = pneg %p136
        %p508 = pneg %p133
        %p509 = pneg %p157
        %p510 = pneg %p154
        %p511 = pneg %p178
        %p512 = pneg %p175
        %p513 = pneg %p199
        %p514 = pneg %p196
        %p515 = pneg %p220
        %p516 = pneg %p217
        %p517 = pneg %p241
        %p518 = pneg %p238
        %p519 = pneg %p262
        %p520 = pneg %p259
        %p521 = pneg %p283
        %p522 = pneg %p280
        %p523 = pneg %p304
        %p524 = pneg %p301
        %p525 = pneg %p330
        %p526 = pneg %p327
        %s527 = sand.u32 %s317, 1
        %s528 = scalar_lea.sflag [#allocation4], %s527
        %s529 = sand.u32 %s317, 1
        %s530 = scalar_lea.vmem [#allocation13], %s529
        %p531 = scmp.lt.s32.totalorder %s31, 1
        %s532 = scalar_select %p531, %s31, 1
        %s533 = smul.addr %s532, 2
        %s534 = smul.addr %s533, 8
        %s535 = scalar_lea.vmem %s0, %s534
        %v536 = vld [vmem:[%s535] sm:$0xff]
        %v537 = vld [vmem:[%s535 + $0x8] sm:$0xff]
        %vm538 = vcmask 261120
        %v539 = vsel %vm538, %v536, 0.0
        %v540 = vsel %vm538, %v537, 0.0
        %v541 = vadd.f32 %v539, %v540
        %v542 = vrot.slane %v541, 4
        %v543 = vadd.f32 %v541, %v542
        %v544 = vrot.slane %v543, 2
        %v545 = vadd.f32 %v543, %v544
        %v546 = vrot.slane %v545, 1
        %v547 = vadd.f32 %v545, %v546
        %v548 = vrcp.pop 16.0
        %v549 = vmul.f32 16.0, %v548
        %v550 = vsub.f32 1.0, %v549
        %v551 = vmul.f32 %v548, %v550
        %v552 = vadd.f32 %v548, %v551
        %vm553 = vweird.f32 %v548
        %v554 = vsel %vm553, %v548, %v552
        %v555 = vmul.f32 %v547, %v554
        %v556 = vld [vmem:[#allocation2] sm:$0x1]
        %v557 = vadd.f32 %v555, %v556
        %v558 = vld [vmem:[#allocation5] sm:$0xff]
        %v559 = vld [vmem:[#allocation5 + $0x8] sm:$0xff]
        %v560 = vadd.f32 %v536, %v558
        %v561 = vadd.f32 %v537, %v559
        %v562 = vld [vmem:[#allocation7] sm:$0xff]
        %v563 = vld [vmem:[#allocation7 + $0x8] sm:$0xff]
        %v564 = vld [vmem:[#allocation7 + $0x10] sm:$0xff]
        %v565 = vld [vmem:[#allocation7 + $0x18] sm:$0xff]
        %v566 = vld [vmem:[#allocation8] sm:$0xff]
        %v567 = vld [vmem:[#allocation8 + $0x8] sm:$0xff]
        %v568 = vld [vmem:[#allocation8 + $0x10] sm:$0xff]
        %v569 = vld [vmem:[#allocation8 + $0x18] sm:$0xff]
        %v570 = vld [vmem:[#allocation10] sm:$0xff]
        %v571 = vld [vmem:[#allocation10 + $0x8] sm:$0xff]
        %v572 = vld [vmem:[#allocation10 + $0x10] sm:$0xff]
        %v573 = vld [vmem:[#allocation10 + $0x18] sm:$0xff]
        %v574 = vld [vmem:[%s4] sm:$0x1]
        %v575 = vld [vmem:[%s6] sm:$0x1]
        %v576 = vld [vmem:[%s8] sm:$0x1]
        %v577 = vld [vmem:[%s11] sm:$0xff]
        %v578 = vld [vmem:[%s11 + $0x8] sm:$0xff]
        %v579 = vld [vmem:[%s11 + $0x10] sm:$0xff]
        %v580 = vld [vmem:[%s11 + $0x18] sm:$0xff]
        %v581 = vld [vmem:[%s12] sm:$0xf]
        %v583 = vsel %vm538, %v557, 0
        %585 = vmatpush.msra.mxu0 0.0
        %586 = vmatpush.msra.mxu0 0.0
        %587 = vmatpush.msra.mxu0 0.0
        %588 = vmatpush.msra.mxu0 0.0
        %589 = vmatpush.msra.mxu0 0.0
        %590 = vmatpush.msra.mxu0 0.0
        %591 = vmatpush.msra.mxu0 0.0
        %592 = vmatpush.msra.mxu0 0.0
        %593 = vmatpush.msra.mxu0 0.0
        %594 = vmatpush.msra.mxu0 0.0
        %595 = vmatpush.msra.mxu0 0.0
        %596 = vmatpush.msra.mxu0 0.0
        %597 = vmatpush.msra.mxu0 %v565
        %598 = vmatpush.msra.mxu0 %v564
        %599 = vmatpush.msra.mxu0 %v563
        %600 = vmatpush.msra.mxu0 %v562
        %601 = vmatmul.f32.gmra.mxu0 %v583
        %v602 = vpop.f32.mrf.mxu0
        %v603 = vadd.f32 %v574, %v602
        %604 = vdwg.mxu0
        %v605 = vmul.f32 %v603, 0.35355338
        %606 = vmatpush.msra.mxu0 0.0
        %607 = vmatpush.msra.mxu0 0.0
        %608 = vmatpush.msra.mxu0 0.0
        %609 = vmatpush.msra.mxu0 0.0
        %610 = vmatpush.msra.mxu0 0.0
        %611 = vmatpush.msra.mxu0 0.0
        %612 = vmatpush.msra.mxu0 0.0
        %613 = vmatpush.msra.mxu0 0.0
        %614 = vmatpush.msra.mxu0 0.0
        %615 = vmatpush.msra.mxu0 0.0
        %616 = vmatpush.msra.mxu0 0.0
        %617 = vmatpush.msra.mxu0 0.0
        %618 = vmatpush.msra.mxu0 %v569
        %619 = vmatpush.msra.mxu0 %v568
        %620 = vmatpush.msra.mxu0 %v567
        %621 = vmatpush.msra.mxu0 %v566
        %622 = vmatmul.f32.gmra.mxu0 %v583
        %v623 = vpop.f32.mrf.mxu0
        %v624 = vadd.f32 %v575, %v623
        %625 = vdwg.mxu0
        %626 = vmatpush.msra.mxu0 0.0
        %627 = vmatpush.msra.mxu0 0.0
        %628 = vmatpush.msra.mxu0 0.0
        %629 = vmatpush.msra.mxu0 0.0
        %630 = vmatpush.msra.mxu0 0.0
        %631 = vmatpush.msra.mxu0 0.0
        %632 = vmatpush.msra.mxu0 0.0
        %633 = vmatpush.msra.mxu0 0.0
        %634 = vmatpush.msra.mxu0 0.0
        %635 = vmatpush.msra.mxu0 0.0
        %636 = vmatpush.msra.mxu0 0.0
        %637 = vmatpush.msra.mxu0 0.0
        %638 = vmatpush.msra.mxu0 %v573
        %639 = vmatpush.msra.mxu0 %v572
        %640 = vmatpush.msra.mxu0 %v571
        %641 = vmatpush.msra.mxu0 %v570
        %642 = vmatmul.f32.gmra.mxu0 %v583
        %v643 = vpop.f32.mrf.mxu0
        %v644 = vadd.f32 %v576, %v643
        %645 = vdwg.mxu0
        %v647 = vperm.slane %v575, 0
        %v650 = vsel %vm538, %v560, 0
        %v653 = vsel %vm538, %v561, 0
        %655 = vmatpush.msra.mxu0 0.0
        %656 = vmatpush.msra.mxu0 0.0
        %657 = vmatpush.msra.mxu0 0.0
        %658 = vmatpush.msra.mxu0 0.0
        %659 = vmatpush.msra.mxu0 0.0
        %660 = vmatpush.msra.mxu0 0.0
        %661 = vmatpush.msra.mxu0 0.0
        %662 = vmatpush.msra.mxu0 0.0
        %663 = vmatpush.msra.mxu0 0.0
        %664 = vmatpush.msra.mxu0 0.0
        %665 = vmatpush.msra.mxu0 0.0
        %666 = vmatpush.msra.mxu0 0.0
        %667 = vmatpush.msra.mxu0 %v569
        %668 = vmatpush.msra.mxu0 %v568
        %669 = vmatpush.msra.mxu0 %v567
        %670 = vmatpush.msra.mxu0 %v566
        %671 = vmatmul.f32.gmra.mxu0 %v650
        %v672 = vpop.f32.mrf.mxu0
        %v673 = vadd.f32 %v647, %v672
        %674 = vmatmul.f32.gmra.mxu0 %v653
        %v675 = vpop.f32.mrf.mxu0
        %v676 = vadd.f32 %v647, %v675
        %677 = vdwg.mxu0
        %v679 = vperm.slane %v576, 0
        %681 = vmatpush.msra.mxu0 0.0
        %682 = vmatpush.msra.mxu0 0.0
        %683 = vmatpush.msra.mxu0 0.0
        %684 = vmatpush.msra.mxu0 0.0
        %685 = vmatpush.msra.mxu0 0.0
        %686 = vmatpush.msra.mxu0 0.0
        %687 = vmatpush.msra.mxu0 0.0
        %688 = vmatpush.msra.mxu0 0.0
        %689 = vmatpush.msra.mxu0 0.0
        %690 = vmatpush.msra.mxu0 0.0
        %691 = vmatpush.msra.mxu0 0.0
        %692 = vmatpush.msra.mxu0 0.0
        %693 = vmatpush.msra.mxu0 %v573
        %694 = vmatpush.msra.mxu0 %v572
        %695 = vmatpush.msra.mxu0 %v571
        %696 = vmatpush.msra.mxu0 %v570
        %697 = vmatmul.f32.gmra.mxu0 %v650
        %v698 = vpop.f32.mrf.mxu0
        %v699 = vadd.f32 %v679, %v698
        %700 = vmatmul.f32.gmra.mxu0 %v653
        %v701 = vpop.f32.mrf.mxu0
        %v702 = vadd.f32 %v679, %v701
        %703 = vdwg.mxu0
        %v704 = vmul.f32 %v605, %v624
        %v706 = vsel %vm538, %v704, 0
        %708 = vmatpush.msra.mxu0 0.0
        %709 = vmatpush.msra.mxu0 0.0
        %710 = vmatpush.msra.mxu0 0.0
        %711 = vmatpush.msra.mxu0 0.0
        %712 = vmatpush.msra.mxu0 0.0
        %713 = vmatpush.msra.mxu0 0.0
        %714 = vmatpush.msra.mxu0 0.0
        %715 = vmatpush.msra.mxu0 0.0
        %716 = vmatpush.msra.mxu0 0.0
        %717 = vmatpush.msra.mxu0 0.0
        %718 = vmatpush.msra.mxu0 0.0
        %719 = vmatpush.msra.mxu0 0.0
        %720 = vmatpush.msra.mxu0 %v580
        %721 = vmatpush.msra.mxu0 %v579
        %722 = vmatpush.msra.mxu0 %v578
        %723 = vmatpush.msra.mxu0 %v577
        %724 = vmatmul.f32.gmra.mxu0 %v706
        %v725 = vpop.f32.mrf.mxu0
        %v726 = vadd.f32 0.0, %v725
        %727 = vdwg.mxu0
        %v728 = vperm.slane %v605, 0
        %v729 = vmul.f32 %v728, %v673
        %v730 = vmul.f32 %v728, %v676
        %v732 = vsel %vm538, %v729, 0
        %v735 = vsel %vm538, %v730, 0
        %737 = vmatpush.msra.mxu0 0.0
        %738 = vmatpush.msra.mxu0 0.0
        %739 = vmatpush.msra.mxu0 0.0
        %740 = vmatpush.msra.mxu0 0.0
        %741 = vmatpush.msra.mxu0 0.0
        %742 = vmatpush.msra.mxu0 0.0
        %743 = vmatpush.msra.mxu0 0.0
        %744 = vmatpush.msra.mxu0 0.0
        %745 = vmatpush.msra.mxu0 0.0
        %746 = vmatpush.msra.mxu0 0.0
        %747 = vmatpush.msra.mxu0 0.0
        %748 = vmatpush.msra.mxu0 0.0
        %749 = vmatpush.msra.mxu0 %v580
        %750 = vmatpush.msra.mxu0 %v579
        %751 = vmatpush.msra.mxu0 %v578
        %752 = vmatpush.msra.mxu0 %v577
        %753 = vmatmul.f32.gmra.mxu0 %v732
        %v754 = vpop.f32.mrf.mxu0
        %v755 = vadd.f32 0.0, %v754
        %756 = vmatmul.f32.gmra.mxu0 %v735
        %v757 = vpop.f32.mrf.mxu0
        %v758 = vadd.f32 0.0, %v757
        %759 = vdwg.mxu0
        %vm760 = vcmask 31744
        %v761 = vsel %vm760, %v755, -inf
        %v762 = vsel %vm760, %v758, -inf
        %v763 = vmax.f32 %v761, %v762
        %v764 = vrot.slane %v763, 4
        %v765 = vmax.f32 %v763, %v764
        %v766 = vrot.slane %v765, 2
        %v767 = vmax.f32 %v765, %v766
        %v768 = vrot.slane %v767, 1
        %v769 = vmax.f32 %v767, %v768
        %v770 = vmax.f32 %v726, %v769
        %v771 = vsub.f32 %v726, %v770
        %v772 = vmul.f32 %v771, 1.442695
        %v773 = vpow.pop %v772
        %v774 = vperm.slane %v770, 0
        %v775 = vsub.f32 %v755, %v774
        %v776 = vsub.f32 %v758, %v774
        %v777 = vmul.f32 %v775, 1.442695
        %v778 = vpow.pop %v777
        %v779 = vmul.f32 %v776, 1.442695
        %v780 = vpow.pop %v779
        %v781 = vsel %vm760, %v778, 0.0
        %v782 = vsel %vm760, %v780, 0.0
        %v783 = vadd.f32 %v781, %v782
        %v784 = vrot.slane %v783, 4
        %v785 = vadd.f32 %v783, %v784
        %v786 = vrot.slane %v785, 2
        %v787 = vadd.f32 %v785, %v786
        %v788 = vrot.slane %v787, 1
        %v789 = vadd.f32 %v787, %v788
        %v790 = vadd.f32 %v773, %v789
        %v791 = vrcp.pop %v790
        %v793 = vsel %vm760, %v773, 0
        %vm795 = vcmask 1043456
        %v797 = vsel %vm795, %v581, 0
        %799 = vmatpush.msra.mxu0 0.0
        %800 = vmatpush.msra.mxu0 0.0
        %801 = vmatpush.msra.mxu0 0.0
        %802 = vmatpush.msra.mxu0 0.0
        %803 = vmatpush.msra.mxu0 0.0
        %804 = vmatpush.msra.mxu0 0.0
        %805 = vmatpush.msra.mxu0 0.0
        %806 = vmatpush.msra.mxu0 0.0
        %807 = vmatpush.msra.mxu0 0.0
        %808 = vmatpush.msra.mxu0 0.0
        %809 = vmatpush.msra.mxu0 0.0
        %810 = vmatpush.msra.mxu0 0.0
        %811 = vmatpush.msra.mxu0 0.0
        %812 = vmatpush.msra.mxu0 0.0
        %813 = vmatpush.msra.mxu0 0.0
        %814 = vmatpush.msra.mxu0 %v797
        %815 = vmatmul.f32.gmra.mxu0 %v793
        %v816 = vpop.f32.mrf.mxu0
        %v817 = vadd.f32 0.0, %v816
        %818 = vdwg.mxu0
        %v820 = vsel %vm760, %v778, 0
        %v823 = vsel %vm760, %v780, 0
        %825 = vmatpush.msra.mxu0 0.0
        %826 = vmatpush.msra.mxu0 0.0
        %827 = vmatpush.msra.mxu0 0.0
        %828 = vmatpush.msra.mxu0 0.0
        %829 = vmatpush.msra.mxu0 0.0
        %830 = vmatpush.msra.mxu0 0.0
        %831 = vmatpush.msra.mxu0 0.0
        %832 = vmatpush.msra.mxu0 0.0
        %833 = vmatpush.msra.mxu0 0.0
        %834 = vmatpush.msra.mxu0 0.0
        %835 = vmatpush.msra.mxu0 0.0
        %836 = vmatpush.msra.mxu0 0.0
        %837 = vmatpush.msra.mxu0 0.0
        %838 = vmatpush.msra.mxu0 0.0
        %839 = vmatpush.msra.mxu0 0.0
        %840 = vmatpush.msra.mxu0 %v797
        %841 = vmatmul.f32.gmra.mxu0 %v820
        %v842 = vpop.f32.mrf.mxu0
        %v843 = vadd.f32 0.0, %v842
        %844 = vmatmul.f32.gmra.mxu0 %v823
        %v845 = vpop.f32.mrf.mxu0
        %v846 = vadd.f32 0.0, %v845
        %847 = vdwg.mxu0
        %v849 = vsel %vm760, %v791, 0
        %851 = vmatpush.msra.mxu0 0.0
        %852 = vmatpush.msra.mxu0 0.0
        %853 = vmatpush.msra.mxu0 0.0
        %854 = vmatpush.msra.mxu0 0.0
        %855 = vmatpush.msra.mxu0 0.0
        %856 = vmatpush.msra.mxu0 0.0
        %857 = vmatpush.msra.mxu0 0.0
        %858 = vmatpush.msra.mxu0 0.0
        %859 = vmatpush.msra.mxu0 0.0
        %860 = vmatpush.msra.mxu0 0.0
        %861 = vmatpush.msra.mxu0 0.0
        %862 = vmatpush.msra.mxu0 0.0
        %863 = vmatpush.msra.mxu0 0.0
        %864 = vmatpush.msra.mxu0 0.0
        %865 = vmatpush.msra.mxu0 0.0
        %866 = vmatpush.msra.mxu0 %v797
        %867 = vmatmul.f32.gmra.mxu0 %v849
        %v868 = vpop.f32.mrf.mxu0
        %v869 = vadd.f32 0.0, %v868
        %870 = vdwg.mxu0
        %v871 = vmul.f32 %v817, %v644
        %v872 = vmul.f32 %v843, %v699
        %v873 = vmul.f32 %v846, %v702
        %v874 = vsel %vm538, %v872, 0.0
        %v875 = vsel %vm538, %v873, 0.0
        %v876 = vadd.f32 %v874, %v875
        %v877 = vrot.slane %v876, 4
        %v878 = vadd.f32 %v876, %v877
        %v879 = vrot.slane %v878, 2
        %v880 = vadd.f32 %v878, %v879
        %v881 = vrot.slane %v880, 1
        %v882 = vadd.f32 %v880, %v881
        %v883 = vadd.f32 %v871, %v882
        %v884 = vmul.f32 %v883, %v869
        %v885 = vld [vmem:[#allocation11] sm:$0xff]
        %v886 = vld [vmem:[#allocation11 + $0x8] sm:$0xff]
        %v887 = vld [vmem:[#allocation11 + $0x10] sm:$0xff]
        %v888 = vld [vmem:[#allocation11 + $0x18] sm:$0xff]
        %v889 = vld [vmem:[%s10] sm:$0x1]
        %v891 = vsel %vm538, %v884, 0
        %893 = vmatpush.msra.mxu0 0.0
        %894 = vmatpush.msra.mxu0 0.0
        %895 = vmatpush.msra.mxu0 0.0
        %896 = vmatpush.msra.mxu0 0.0
        %897 = vmatpush.msra.mxu0 0.0
        %898 = vmatpush.msra.mxu0 0.0
        %899 = vmatpush.msra.mxu0 0.0
        %900 = vmatpush.msra.mxu0 0.0
        %901 = vmatpush.msra.mxu0 0.0
        %902 = vmatpush.msra.mxu0 0.0
        %903 = vmatpush.msra.mxu0 0.0
        %904 = vmatpush.msra.mxu0 0.0
        %905 = vmatpush.msra.mxu0 %v888
        %906 = vmatpush.msra.mxu0 %v887
        %907 = vmatpush.msra.mxu0 %v886
        %908 = vmatpush.msra.mxu0 %v885
        %909 = vmatmul.f32.gmra.mxu0 %v891
        %v910 = vpop.f32.mrf.mxu0
        %v911 = vadd.f32 %v889, %v910
        %912 = vdwg.mxu0
        %vm913 = vcmask 253952
        %914 = vst.msk [vmem:[%s530] sm:$0x1] %vm913, %v911
        %s915 = sand.u32 %s317, 1
        %s916 = scalar_lea.sflag [#allocation4], %s915
        %s917 = sand.u32 %s317, 1
        %s918 = scalar_lea.vmem [#allocation13], %s917
        // Predicated region
        $region97: #{tpu_custom_call.1} parent=71 // pred_check
          %p919 = pneg %p327
        $region98: #{tpu_custom_call.1} parent=71 // pred_check_branch
          %921 = sbr.rel (%p919) target = $region100
        $region99: #{tpu_custom_call.1} parent=71 // pred_region
          %923 = vsyncadd %s916, 0
          %s924 = scalar_lea.hbm %s13, %s31
          %s926 = sshll.u32 %s918, 4
          %s927 = int_to_ptr.vmem [resolvable:$true] %s926
          %s928 = sshll.u32 %s924, 4
          %s929 = int_to_ptr.hbm [resolvable:$true] %s928
          %931 = dma.vmem_to_hbm [thread:$0]  %s927, 16, %s929, %s916
        $region100: #{tpu_custom_call.1} parent=71 // pred_fallthru
          _
      $region72: #{tpu_custom_call.1} parent=5 // pred_fallthru
        _
      %p932 = scmp.le.s32.totalorder 2, %s26
      // Predicated region
      $region101: #{tpu_custom_call.1} parent=5 // pred_check
        %p933 = pneg %p932
      $region102: #{tpu_custom_call.1} parent=5 // pred_check_branch
        %935 = sbr.rel (%p933) target = $region104
      $region103: #{tpu_custom_call.1} parent=5 // pred_region
        %s936 = ssub.s32 %s26, 2
        // Predicated region
        $region105: #{tpu_custom_call.1} parent=103 // pred_check
          %p937 = pneg %p333
        $region106: #{tpu_custom_call.1} parent=103 // pred_check_branch
          %939 = sbr.rel (%p937) target = $region108
        $region107: #{tpu_custom_call.1} parent=103 // pred_region
          %s940 = sand.u32 %s318, 1
          %s941 = scalar_lea.sflag [#allocation4], %s940
          %s942 = sand.u32 %s318, 1
          %s943 = scalar_lea.vmem [#allocation13], %s942
          %945 = dma.done %s941, 16
        $region108: #{tpu_custom_call.1} parent=103 // pred_fallthru
          _
      $region104: #{tpu_custom_call.1} parent=5 // pred_fallthru
        _
    $region6: #{tpu_custom_call.1} parent=1 // loop_footer
      %s30 = sadd.s32 1, %s26
    $region7: #{tpu_custom_call.1} parent=1 // loop_footer_branch
      %25 = sbr.rel target = $region3
    $region8: #{tpu_custom_call.1} parent=1 // loop_exit
      _
    %946 = vsyncpa [#allocation3], 1
    %s947 = scalar_lea.sflag [#allocation3], 1
    %948 = vsyncpa %s947, 1
    %949 = vsyncpa [#allocation6], 1
    %950 = vsyncpa [#allocation9], 1
    %951 = vsyncpa [#allocation12], 1
    %952 = vsyncpa [#allocation4], 1
    %s953 = scalar_lea.sflag [#allocation4], 1
    %954 = vsyncpa %s953, 1

</llo_original>
